<compile_context>
chip_gen: v7x
topology: tpu7x:2x2x1
jax: 0.10.0
libtpu: 0.0.40
codegen_flags: <defaults>
</compile_context>

<pallas_src>
import functools

import jax
import jax.numpy as jnp
import numpy as np
from jax import lax
from jax.experimental import pallas as pl
from jax.experimental.pallas import tpu as pltpu

C_OUT_PAD = 128  # lane-dense output feature width (one full vreg lane row)


def _round_up(v, m):
    return (v + m - 1) // m * m


def _graph_conv_layer_kernel(x_ref, adjt_ref, w_ref, b_ref, o_ref):
    """One grid step == one GraphConvReLU layer; h lives in o_ref across steps.

    x_ref:    (N_PAD, C_OUT_PAD)           padded input features (used at layer 0 only)
    adjt_ref: (E*N_PAD, N_PAD)             vstack_e(edges[e].T), resident across layers
    w_ref:    (1, E, C_IN_PAD, C_OUT_PAD)  this layer's padded weights (double-buffered)
    b_ref:    (1, 1, C_OUT_PAD)            this layer's padded bias
    o_ref:    (N_PAD, C_OUT_PAD)           resident h buffer / final output
    """
    layer = pl.program_id(0)
    num_edge = w_ref.shape[1]
    c_in_pad = w_ref.shape[2]
    n_pad = o_ref.shape[0]

    @pl.when(layer == 0)
    def _():
        o_ref[...] = x_ref[...]

    # Only the live (padded-to-8) feature lanes participate in the contraction.
    h_in = o_ref[...][:, :c_in_pad]                       # (N_PAD, C_IN_PAD)

    # S[e*N_PAD + i, :] = (edges[e].T @ h)[i, :]  -- one matmul, K = N_PAD.
    s = jnp.dot(adjt_ref[...], h_in,
                preferred_element_type=jnp.float32)       # (E*N_PAD, C_IN_PAD)

    # Accumulate the E edge-style contributions in vregs (static unroll).
    acc = jnp.dot(s[0:n_pad, :], w_ref[0, 0],
                  preferred_element_type=jnp.float32)     # (N_PAD, C_OUT_PAD)
    for e in range(1, num_edge):
        acc = acc + jnp.dot(s[e * n_pad:(e + 1) * n_pad, :], w_ref[0, e],
                            preferred_element_type=jnp.float32)

    # TODO(synk): training-mode dropout would be applied to (acc + bias) here.
    o_ref[...] = jnp.maximum(acc + b_ref[0], 0.0)


def prepare_graph_conv_stack(edges, params):
    """One-time layout prep; reuse the results across forward calls.

    edges: (E, N, N); params[l] = (W_l (E, Cin_l, Cout), b_l (Cout,)).
    Returns (adjt, w_pad, b_pad) ready for graph_conv_stack_forward.
    """
    num_edge, n, _ = edges.shape
    c_in0 = params[0][0].shape[1]
    c_out = params[0][0].shape[2]
    assert params[0][0].shape[0] == num_edge
    assert max(c_in0, c_out) <= C_OUT_PAD, "feature width > 128 lanes not supported"
    for (w, b) in params[1:]:
        assert w.shape == (num_edge, c_out, c_out) and b.shape == (c_out,), (
            "all layers after the first must be (E, Cout, Cout) / (Cout,)")

    n_pad = _round_up(n, 8)
    c_in_pad = _round_up(max(c_in0, c_out), 8)

    # vstack_e(edges[e].T), zero-padded to N_PAD rows/cols.
    e_pad = jnp.zeros((num_edge, n_pad, n_pad), jnp.float32).at[:, :n, :n].set(
        edges.astype(jnp.float32))
    adjt = jnp.transpose(e_pad, (0, 2, 1)).reshape(num_edge * n_pad, n_pad)

    w_list, b_list = [], []
    for (w, b) in params:
        ci = w.shape[1]
        w_list.append(
            jnp.zeros((num_edge, c_in_pad, C_OUT_PAD), jnp.float32)
            .at[:, :ci, :c_out].set(w.astype(jnp.float32)))
        b_list.append(
            jnp.zeros((1, C_OUT_PAD), jnp.float32).at[0, :c_out].set(
                b.astype(jnp.float32)))
    w_pad = jnp.stack(w_list)   # (L, E, C_IN_PAD, C_OUT_PAD)
    b_pad = jnp.stack(b_list)   # (L, 1, C_OUT_PAD)
    return adjt, w_pad, b_pad


@functools.partial(jax.jit, static_argnames=("c_out",))
def graph_conv_stack_forward(x, adjt, w_pad, b_pad, c_out):
    """x: (1, N, Cin).  Returns (1, N, c_out) — eval-mode GraphConvStack forward."""
    _, n, c_in0 = x.shape
    num_layers, num_edge, c_in_pad, c_out_pad = w_pad.shape
    n_pad = adjt.shape[1]

    # Per-call prep: only the (tiny) feature padding of x.
    x_pad = jnp.zeros((n_pad, c_out_pad), jnp.float32).at[:n, :c_in0].set(
        x[0].astype(jnp.float32))

    # VMEM footprint: x + adjt + resident output + double-buffered per-layer W and b.
    f32b = 4
    footprint = f32b * (x_pad.size + adjt.size + n_pad * c_out_pad
                        + 2 * num_edge * c_in_pad * c_out_pad + 2 * c_out_pad)
    vmem_limit = int(min(64 * 1024 * 1024,
                         max(2 * footprint + (1 << 20), 1 << 22)))

    out_pad = pl.pallas_call(
        _graph_conv_layer_kernel,
        out_shape=jax.ShapeDtypeStruct((n_pad, c_out_pad), jnp.float32),
        grid_spec=pltpu.PrefetchScalarGridSpec(
            num_scalar_prefetch=0,
            grid=(num_layers,),
            in_specs=[
                pl.BlockSpec((n_pad, c_out_pad), lambda l: (0, 0)),           # x_pad
                pl.BlockSpec((num_edge * n_pad, n_pad), lambda l: (0, 0)),    # adjt
                pl.BlockSpec((1, num_edge, c_in_pad, c_out_pad),
                             lambda l: (l, 0, 0, 0)),                         # W[l]
                pl.BlockSpec((1, 1, c_out_pad), lambda l: (l, 0, 0)),         # b[l]
            ],
            out_specs=pl.BlockSpec((n_pad, c_out_pad), lambda l: (0, 0)),     # resident h
        ),
        compiler_params=pltpu.CompilerParams(
            dimension_semantics=("arbitrary",),
            vmem_limit_bytes=vmem_limit),
    )(x_pad, adjt, w_pad, b_pad)

    # Strip the row/lane padding outside the kernel.
    return out_pad[None, :n, :c_out]


def init_graph_conv_params(key, input_size, output_size, num_edge_style):
    """Matches GraphConv.init_parameters: uniform(-stdv, stdv), stdv = 1/sqrt(E*out)."""
    stdv = 1.0 / float(num_edge_style * output_size) ** 0.5
    kw, kb = jax.random.split(key)
    w = jax.random.uniform(kw, (num_edge_style, input_size, output_size),
                           minval=-stdv, maxval=stdv, dtype=jnp.float32)
    b = jax.random.uniform(kb, (output_size,),
                           minval=-stdv, maxval=stdv, dtype=jnp.float32)
    return w, b


def init_graph_conv_stack(key, input_size, output_size, num_edge_style, num_layers):
    keys = jax.random.split(key, num_layers)
    params = [init_graph_conv_params(keys[0], input_size, output_size, num_edge_style)]
    for i in range(1, num_layers):
        params.append(
            init_graph_conv_params(keys[i], output_size, output_size, num_edge_style))
    return params


def _reference_forward(x, edges, params):
    """Pure-JAX reference of the PyTorch forward (eval mode)."""
    h = x  # (1, N, C)
    for (w, b) in params:
        act = jnp.matmul(jnp.swapaxes(edges, 1, 2), h,
                         precision=lax.Precision.HIGHEST)        # (E, N, Cin)
        conv = jnp.sum(jnp.einsum('eni,eio->eno', act, w,
                                  precision=lax.Precision.HIGHEST),
                       axis=0)[None] + b
        h = jnp.maximum(conv, 0.0)
    return h


if __name__ == "__main__":
    # Small shapes consistent with the module's forward.
    input_size = 8
    output_size = 32
    num_edge_style = 4
    num_layers = 2
    N = 16  # number of graph nodes (notes)

    key = jax.random.PRNGKey(0)
    k_x, k_e, k_p = jax.random.split(key, 3)

    x = jax.random.normal(k_x, (1, N, input_size), dtype=jnp.float32)
    # Synthetic 0/1 adjacency matrices (one per edge style).
    edges = (jax.random.uniform(k_e, (num_edge_style, N, N)) > 0.7).astype(jnp.float32)

    params = init_graph_conv_stack(k_p, input_size, output_size,
                                   num_edge_style, num_layers)
    params = [(jnp.asarray(w), jnp.asarray(b)) for (w, b) in params]

    # One-time layout prep (hoisted out of the per-call path).
    adjt, w_pad, b_pad = prepare_graph_conv_stack(edges, params)

    out = graph_conv_stack_forward(x, adjt, w_pad, b_pad, c_out=output_size)
    out = jax.block_until_ready(out)

    ref = _reference_forward(x, edges, params)
    np.testing.assert_allclose(np.asarray(out), np.asarray(ref), rtol=1e-5, atol=1e-5)

    print("KERNEL_OK")
</pallas_src>

<mosaic_0001>
module attributes {stable_mosaic.version = 11 : i64} {
  func.func @_graph_conv_layer_kernel(%arg0: i32, %arg1: memref<16x128xf32, #tpu.memory_space<vmem>>, %arg2: memref<64x16xf32, #tpu.memory_space<vmem>>, %arg3: memref<1x4x32x128xf32, #tpu.memory_space<vmem>>, %arg4: memref<1x1x128xf32, #tpu.memory_space<vmem>>, %arg5: memref<16x128xf32, #tpu.memory_space<vmem>>) attributes {dimension_semantics = [#tpu.dimension_semantics<arbitrary>], iteration_bounds = array<i64: 2>, scalar_prefetch = 0 : i64, scratch_operands = 0 : i64, tpu.core_type = #tpu.core_type<tc>, window_params = [{pipeline_mode = #tpu.pipeline_mode<synchronous>, transform_indices = @transform_0, window_bounds = array<i64: 16, 128>}, {pipeline_mode = #tpu.pipeline_mode<synchronous>, transform_indices = @transform_1, window_bounds = array<i64: 64, 16>}, {transform_indices = @transform_2, window_bounds = array<i64: 1, 4, 32, 128>}, {transform_indices = @transform_3, window_bounds = array<i64: 1, 1, 128>}, {pipeline_mode = #tpu.pipeline_mode<synchronous>, transform_indices = @transform_4, window_bounds = array<i64: 16, 128>}]} {
    %c0_i32 = arith.constant 0 : i32
    %0 = arith.cmpi eq, %arg0, %c0_i32 : i32
    %1 = arith.extui %0 : i1 to i32
    %c0_i32_0 = arith.constant 0 : i32
    %2 = arith.cmpi ne, %1, %c0_i32_0 : i32
    scf.if %2 {
      %c0_27 = arith.constant 0 : index
      %c0_28 = arith.constant 0 : index
      %33 = vector.load %arg1[%c0_27, %c0_28] : memref<16x128xf32, #tpu.memory_space<vmem>>, vector<16x128xf32>
      %c0_29 = arith.constant 0 : index
      %c0_30 = arith.constant 0 : index
      %34 = vector.load %arg5[%c0_29, %c0_30] : memref<16x128xf32, #tpu.memory_space<vmem>>, vector<16x128xf32>
      tpu.vector_store %arg5[%c0_29, %c0_30], %33 {strides = array<i32>} : memref<16x128xf32, #tpu.memory_space<vmem>>, vector<16x128xf32>,
    } else {
    }
    %c0 = arith.constant 0 : index
    %c0_1 = arith.constant 0 : index
    %3 = vector.load %arg5[%c0, %c0_1] : memref<16x128xf32, #tpu.memory_space<vmem>>, vector<16x128xf32>
    %4 = vector.extract_strided_slice %3 {offsets = [0, 0], sizes = [16, 32], strides = [1, 1]} : vector<16x128xf32> to vector<16x32xf32>
    %c0_2 = arith.constant 0 : index
    %c0_3 = arith.constant 0 : index
    %5 = vector.load %arg2[%c0_2, %c0_3] : memref<64x16xf32, #tpu.memory_space<vmem>>, vector<64x16xf32>
    %cst = arith.constant dense<0.000000e+00> : vector<64x32xf32>
    %6 = tpu.matmul %5, %4, %cst {dimension_numbers = #tpu.dot_dimension_numbers<[1], [0], [0], [1], [0, 0, 1, 1], [], []>} : vector<64x16xf32>, vector<16x32xf32>, vector<64x32xf32> -> vector<64x32xf32>
    %7 = vector.extract_strided_slice %6 {offsets = [0, 0], sizes = [16, 32], strides = [1, 1]} : vector<64x32xf32> to vector<16x32xf32>
    %c0_4 = arith.constant 0 : index
    %c0_5 = arith.constant 0 : index
    %c0_6 = arith.constant 0 : index
    %c0_7 = arith.constant 0 : index
    %8 = vector.load %arg3[%c0_4, %c0_5, %c0_6, %c0_7] : memref<1x4x32x128xf32, #tpu.memory_space<vmem>>, vector<1x1x32x128xf32>
    %9 = vector.shape_cast %8 : vector<1x1x32x128xf32> to vector<32x128xf32>
    %cst_8 = arith.constant dense<0.000000e+00> : vector<16x128xf32>
    %10 = tpu.matmul %7, %9, %cst_8 {dimension_numbers = #tpu.dot_dimension_numbers<[1], [0], [0], [1], [0, 0, 1, 1], [], []>} : vector<16x32xf32>, vector<32x128xf32>, vector<16x128xf32> -> vector<16x128xf32>
    %11 = vector.extract_strided_slice %6 {offsets = [16, 0], sizes = [16, 32], strides = [1, 1]} : vector<64x32xf32> to vector<16x32xf32>
    %c0_9 = arith.constant 0 : index
    %c1 = arith.constant 1 : index
    %c0_10 = arith.constant 0 : index
    %c0_11 = arith.constant 0 : index
    %12 = vector.load %arg3[%c0_9, %c1, %c0_10, %c0_11] : memref<1x4x32x128xf32, #tpu.memory_space<vmem>>, vector<1x1x32x128xf32>
    %13 = vector.shape_cast %12 : vector<1x1x32x128xf32> to vector<32x128xf32>
    %cst_12 = arith.constant dense<0.000000e+00> : vector<16x128xf32>
    %14 = tpu.matmul %11, %13, %cst_12 {dimension_numbers = #tpu.dot_dimension_numbers<[1], [0], [0], [1], [0, 0, 1, 1], [], []>} : vector<16x32xf32>, vector<32x128xf32>, vector<16x128xf32> -> vector<16x128xf32>
    %15 = arith.addf %10, %14 : vector<16x128xf32>
    %16 = vector.extract_strided_slice %6 {offsets = [32, 0], sizes = [16, 32], strides = [1, 1]} : vector<64x32xf32> to vector<16x32xf32>
    %c0_13 = arith.constant 0 : index
    %c2 = arith.constant 2 : index
    %c0_14 = arith.constant 0 : index
    %c0_15 = arith.constant 0 : index
    %17 = vector.load %arg3[%c0_13, %c2, %c0_14, %c0_15] : memref<1x4x32x128xf32, #tpu.memory_space<vmem>>, vector<1x1x32x128xf32>
    %18 = vector.shape_cast %17 : vector<1x1x32x128xf32> to vector<32x128xf32>
    %cst_16 = arith.constant dense<0.000000e+00> : vector<16x128xf32>
    %19 = tpu.matmul %16, %18, %cst_16 {dimension_numbers = #tpu.dot_dimension_numbers<[1], [0], [0], [1], [0, 0, 1, 1], [], []>} : vector<16x32xf32>, vector<32x128xf32>, vector<16x128xf32> -> vector<16x128xf32>
    %20 = arith.addf %15, %19 : vector<16x128xf32>
    %21 = vector.extract_strided_slice %6 {offsets = [48, 0], sizes = [16, 32], strides = [1, 1]} : vector<64x32xf32> to vector<16x32xf32>
    %c0_17 = arith.constant 0 : index
    %c3 = arith.constant 3 : index
    %c0_18 = arith.constant 0 : index
    %c0_19 = arith.constant 0 : index
    %22 = vector.load %arg3[%c0_17, %c3, %c0_18, %c0_19] : memref<1x4x32x128xf32, #tpu.memory_space<vmem>>, vector<1x1x32x128xf32>
    %23 = vector.shape_cast %22 : vector<1x1x32x128xf32> to vector<32x128xf32>
    %cst_20 = arith.constant dense<0.000000e+00> : vector<16x128xf32>
    %24 = tpu.matmul %21, %23, %cst_20 {dimension_numbers = #tpu.dot_dimension_numbers<[1], [0], [0], [1], [0, 0, 1, 1], [], []>} : vector<16x32xf32>, vector<32x128xf32>, vector<16x128xf32> -> vector<16x128xf32>
    %25 = arith.addf %20, %24 : vector<16x128xf32>
    %c0_21 = arith.constant 0 : index
    %c0_22 = arith.constant 0 : index
    %c0_23 = arith.constant 0 : index
    %26 = vector.load %arg4[%c0_21, %c0_22, %c0_23] : memref<1x1x128xf32, #tpu.memory_space<vmem>>, vector<1x1x128xf32>
    %27 = vector.shape_cast %26 : vector<1x1x128xf32> to vector<1x128xf32>
    %28 = vector.broadcast %27 : vector<1x128xf32> to vector<16x128xf32>
    %29 = arith.addf %25, %28 : vector<16x128xf32>
    %cst_24 = arith.constant 0.000000e+00 : f32
    %30 = vector.broadcast %cst_24 : f32 to vector<16x128xf32>
    %31 = arith.maximumf %29, %30 : vector<16x128xf32>
    %c0_25 = arith.constant 0 : index
    %c0_26 = arith.constant 0 : index
    %32 = vector.load %arg5[%c0_25, %c0_26] : memref<16x128xf32, #tpu.memory_space<vmem>>, vector<16x128xf32>
    tpu.vector_store %arg5[%c0_25, %c0_26], %31 {strides = array<i32>} : memref<16x128xf32, #tpu.memory_space<vmem>>, vector<16x128xf32>,
    return
  }
  func.func @transform_0(%arg0: i32) -> (i32, i32) {
    %c0_i32 = arith.constant 0 : i32
    %c0_i32_0 = arith.constant 0 : i32
    %c0_i32_1 = arith.constant 0 : i32
    return %c0_i32, %c0_i32_0 : i32, i32
  }
  func.func @transform_1(%arg0: i32) -> (i32, i32) {
    %c0_i32 = arith.constant 0 : i32
    %c0_i32_0 = arith.constant 0 : i32
    %c0_i32_1 = arith.constant 0 : i32
    return %c0_i32, %c0_i32_0 : i32, i32
  }
  func.func @transform_2(%arg0: i32) -> (i32, i32, i32, i32) {
    %c0_i32 = arith.constant 0 : i32
    %c0_i32_0 = arith.constant 0 : i32
    %c0_i32_1 = arith.constant 0 : i32
    %c0_i32_2 = arith.constant 0 : i32
    return %arg0, %c0_i32, %c0_i32_0, %c0_i32_1 : i32, i32, i32, i32
  }
  func.func @transform_3(%arg0: i32) -> (i32, i32, i32) {
    %c0_i32 = arith.constant 0 : i32
    %c0_i32_0 = arith.constant 0 : i32
    %c0_i32_1 = arith.constant 0 : i32
    return %arg0, %c0_i32, %c0_i32_0 : i32, i32, i32
  }
  func.func @transform_4(%arg0: i32) -> (i32, i32) {
    %c0_i32 = arith.constant 0 : i32
    %c0_i32_0 = arith.constant 0 : i32
    %c0_i32_1 = arith.constant 0 : i32
    return %c0_i32, %c0_i32_0 : i32, i32
  }
}

</mosaic_0001>

<llo_original>
// kernel: graph_conv_stack_forward.1
$region0: #{graph_conv_stack_forward.1}
  #allocation0 [shape = 'u32[]', space=smem, size = 0x4, offset = 0x4, fixed_abs, tag = 'smem constant byte address 0x4 - core index']
  #allocation1 [shape = 'u32[144,128]{1,0:T(1,128)}', space=vmem, size = 0x12000, scoped, tag = 'internal scratch']
  %s0 = inlined_call_operand.vmem [shape: f32[16,128], index: 0, kind: input, shape index: {}]
  %s1 = inlined_call_operand.vmem [shape: f32[64,16], index: 1, kind: input, shape index: {}]
  %s2 = inlined_call_operand.hbm [shape: f32[2,4,32,128], index: 2, kind: input, shape index: {}]
  %s3 = inlined_call_operand.vmem [shape: f32[2,1,128], index: 3, kind: input, shape index: {}]
  %s4 = inlined_call_operand.vmem [shape: f32[16,128], index: 4, kind: output, shape index: {}]
  %s5 = sld [smem:[#allocation0]]
  $region57: #{graph_conv_stack_forward.1} parent=0
    _
  %s7 = ssub.s32 1, %s5
  %s8 = scalar_select 0, %s7, %s5
  $region1: #{graph_conv_stack_forward.1} parent=0
    #allocation2 [shape = 'u8[131072]{0}', space=vmem, size = 0x20000, scoped, tag = 'input window, operand 2']
    #allocation3 [shape = 's32[2]{0}', space=sflag, size = 0x8, scoped, tag = 'scoped memory for graph_conv_stack_forward.1']
    %9 = vsyncpa [#allocation3], 0
    %s10 = scalar_lea.sflag [#allocation3], 1
    %11 = vsyncpa %s10, 0
    loop: start=0, step=1, limit=4
    $region2: #{graph_conv_stack_forward.1} parent=1 // loop_pre_header
      _
    $region3: #{graph_conv_stack_forward.1} parent=1 // loop_header
      %s13 = sphi 0, %s17
      %p14 = scmp.ge.s32.totalorder %s13, 4
      %s21 = sphi 0, %s21
      %s23 = sphi 0, %s21
      %s24 = sphi 0, %s23
      %s38 = sphi 0, %s24
      %s42 = sphi 0, %s42
      %s44 = sphi 0, %s42
      %s45 = sphi 0, %s44
      %s59 = sphi 0, %s45
      %s65 = sphi 0, %s67
      %s68 = sphi 0, %s65
      %s69 = sphi 0, %s68
      %s85 = sphi 0, %s69
      %s91 = sphi 0, %s93
      %s94 = sphi 0, %s91
      %s95 = sphi 0, %s94
      %s111 = sphi 0, %s95
      %s115 = sphi 0, %s115
      %s117 = sphi 0, %s115
      %s118 = sphi 0, %s117
      %s132 = sphi 0, %s118
    $region4: #{graph_conv_stack_forward.1} parent=1 // loop_header_branch
      %16 = sbr.rel (%p14) target = $region8
    $region5: #{graph_conv_stack_forward.1} parent=1 // loop_body
      %s18 = ssub.s32 %s13, 1
      %s19 = ssub.s32 %s13, 2
      %s20 = sadd.s32 %s13, 1
      %s22 = sadd.s32 %s21, 1
      %p25 = scmp.eq.s32.totalorder %s13, 1
      %p26 = scmp.ne.s32.totalorder %s21, %s23
      %p27 = scmp.eq.s32.totalorder %s13, 0
      %p28 = por %p26, %p27
      %p29 = scmp.ne.s32.totalorder %s21, %s23
      %p30 = scmp.eq.s32.totalorder %s18, 1
      %p31 = por %p29, %p30
      %p32 = scmp.ne.s32.totalorder %s23, %s24
      %p33 = scmp.eq.s32.totalorder %s18, 0
      %p34 = por %p32, %p33
      %p35 = scmp.ne.s32.totalorder %s23, %s24
      %p36 = scmp.eq.s32.totalorder %s19, 1
      %p37 = por %p35, %p36
      %p39 = scmp.ne.s32.totalorder %s24, %s38
      %p40 = scmp.eq.s32.totalorder %s19, 0
      %p41 = por %p39, %p40
      %s43 = sadd.s32 %s42, 1
      %p46 = scmp.eq.s32.totalorder %s13, 1
      %p47 = scmp.ne.s32.totalorder %s42, %s44
      %p48 = scmp.eq.s32.totalorder %s13, 0
      %p49 = por %p47, %p48
      %p50 = scmp.ne.s32.totalorder %s42, %s44
      %p51 = scmp.eq.s32.totalorder %s18, 1
      %p52 = por %p50, %p51
      %p53 = scmp.ne.s32.totalorder %s44, %s45
      %p54 = scmp.eq.s32.totalorder %s18, 0
      %p55 = por %p53, %p54
      %p56 = scmp.ne.s32.totalorder %s44, %s45
      %p57 = scmp.eq.s32.totalorder %s19, 1
      %p58 = por %p56, %p57
      %p60 = scmp.ne.s32.totalorder %s45, %s59
      %p61 = scmp.eq.s32.totalorder %s19, 0
      %p62 = por %p60, %p61
      %s63 = ssub.s32 %s13, %s20
      %p64 = scmp.eq.s32.totalorder %s63, 0
      %s66 = sadd.s32 %s65, 1
      %s67 = scalar_select %p64, %s65, %s66
      %p70 = pneg %p64
      %p71 = scmp.eq.s32.totalorder %s13, 1
      %p72 = por %p70, %p71
      %p73 = scmp.ne.s32.totalorder %s65, %s68
      %p74 = scmp.eq.s32.totalorder %s13, 0
      %p75 = por %p73, %p74
      %p76 = scmp.ne.s32.totalorder %s65, %s68
      %p77 = scmp.eq.s32.totalorder %s18, 1
      %p78 = por %p76, %p77
      %p79 = scmp.ne.s32.totalorder %s68, %s69
      %p80 = scmp.eq.s32.totalorder %s18, 0
      %p81 = por %p79, %p80
      %p82 = scmp.ne.s32.totalorder %s68, %s69
      %p83 = scmp.eq.s32.totalorder %s19, 1
      %p84 = por %p82, %p83
      %p86 = scmp.ne.s32.totalorder %s69, %s85
      %p87 = scmp.eq.s32.totalorder %s19, 0
      %p88 = por %p86, %p87
      %s89 = ssub.s32 %s13, %s20
      %p90 = scmp.eq.s32.totalorder %s89, 0
      %s92 = sadd.s32 %s91, 1
      %s93 = scalar_select %p90, %s91, %s92
      %p96 = pneg %p90
      %p97 = scmp.eq.s32.totalorder %s13, 1
      %p98 = por %p96, %p97
      %p99 = scmp.ne.s32.totalorder %s91, %s94
      %p100 = scmp.eq.s32.totalorder %s13, 0
      %p101 = por %p99, %p100
      %p102 = scmp.ne.s32.totalorder %s91, %s94
      %p103 = scmp.eq.s32.totalorder %s18, 1
      %p104 = por %p102, %p103
      %p105 = scmp.ne.s32.totalorder %s94, %s95
      %p106 = scmp.eq.s32.totalorder %s18, 0
      %p107 = por %p105, %p106
      %p108 = scmp.ne.s32.totalorder %s94, %s95
      %p109 = scmp.eq.s32.totalorder %s19, 1
      %p110 = por %p108, %p109
      %p112 = scmp.ne.s32.totalorder %s95, %s111
      %p113 = scmp.eq.s32.totalorder %s19, 0
      %p114 = por %p112, %p113
      %s116 = sadd.s32 %s115, 1
      %p119 = scmp.eq.s32.totalorder %s13, 1
      %p120 = scmp.ne.s32.totalorder %s115, %s117
      %p121 = scmp.eq.s32.totalorder %s13, 0
      %p122 = por %p120, %p121
      %p123 = scmp.ne.s32.totalorder %s115, %s117
      %p124 = scmp.eq.s32.totalorder %s18, 1
      %p125 = por %p123, %p124
      %p126 = scmp.ne.s32.totalorder %s117, %s118
      %p127 = scmp.eq.s32.totalorder %s18, 0
      %p128 = por %p126, %p127
      %p129 = scmp.ne.s32.totalorder %s117, %s118
      %p130 = scmp.eq.s32.totalorder %s19, 1
      %p131 = por %p129, %p130
      %p133 = scmp.ne.s32.totalorder %s118, %s132
      %p134 = scmp.eq.s32.totalorder %s19, 0
      %p135 = por %p133, %p134
      %p136 = scmp.le.s32.totalorder 1, %s13
      %p137 = scmp.lt.s32.totalorder %s13, 3
      %p138 = pnand %p136, %p137
      %p139 = pneg %p138
      // Predicated region
      $region9: #{graph_conv_stack_forward.1} parent=5 // pred_check
        _
      $region10: #{graph_conv_stack_forward.1} parent=5 // pred_check_branch
        %141 = sbr.rel (%p138) target = $region12
      $region11: #{graph_conv_stack_forward.1} parent=5 // pred_region
        %s142 = ssub.s32 %s13, 1
        // Predicated region
        $region13: #{graph_conv_stack_forward.1} parent=11 // pred_check
          %p143 = pneg %p34
        $region14: #{graph_conv_stack_forward.1} parent=11 // pred_check_branch
          %145 = sbr.rel (%p143) target = $region16
        $region15: #{graph_conv_stack_forward.1} parent=11 // pred_region
          _
        $region16: #{graph_conv_stack_forward.1} parent=11 // pred_fallthru
          _
        // Predicated region
        $region17: #{graph_conv_stack_forward.1} parent=11 // pred_check
          %p146 = pneg %p55
        $region18: #{graph_conv_stack_forward.1} parent=11 // pred_check_branch
          %148 = sbr.rel (%p146) target = $region20
        $region19: #{graph_conv_stack_forward.1} parent=11 // pred_region
          _
        $region20: #{graph_conv_stack_forward.1} parent=11 // pred_fallthru
          _
      $region12: #{graph_conv_stack_forward.1} parent=5 // pred_fallthru
        _
      %p149 = scmp.lt.s32.totalorder %s13, 2
      // Predicated region
      $region21: #{graph_conv_stack_forward.1} parent=5 // pred_check
        %p150 = pneg %p149
      $region22: #{graph_conv_stack_forward.1} parent=5 // pred_check_branch
        %152 = sbr.rel (%p150) target = $region24
      $region23: #{graph_conv_stack_forward.1} parent=5 // pred_region
        // Predicated region
        $region25: #{graph_conv_stack_forward.1} parent=23 // pred_check
          %p153 = pneg %p75
        $region26: #{graph_conv_stack_forward.1} parent=23 // pred_check_branch
          %155 = sbr.rel (%p153) target = $region28
        $region27: #{graph_conv_stack_forward.1} parent=23 // pred_region
          %s156 = sand.u32 %s65, 1
          %s157 = scalar_lea.sflag [#allocation3], %s156
          %s158 = sand.u32 %s65, 1
          %s159 = smul.addr %s158, 128
          %s160 = scalar_lea.vmem [#allocation2], %s159
          %s162 = ssub.s32 2048, 2048
          %163 = vsyncadd %s157, %s162
          %s164 = smul.addr %s13, 16
          %s165 = smul.addr %s164, 128
          %s166 = scalar_lea.hbm %s2, %s165
          %s167 = sshll.u32 %s160, 4
          %s168 = int_to_ptr.vmem [resolvable:$true] %s167
          %173 = dma.hbm_to_vmem [thread:$0]  %s166, 2048, %s168, %s157, 128, 128, 8
        $region28: #{graph_conv_stack_forward.1} parent=23 // pred_fallthru
          _
        // Predicated region
        $region29: #{graph_conv_stack_forward.1} parent=23 // pred_check
          %p174 = pneg %p101
        $region30: #{graph_conv_stack_forward.1} parent=23 // pred_check_branch
          %176 = sbr.rel (%p174) target = $region32
        $region31: #{graph_conv_stack_forward.1} parent=23 // pred_region
          %p177 = scmp.lt.s32.totalorder %s13, 1
          %s178 = scalar_select %p177, %s13, 1
          %s179 = scalar_lea.vmem %s3, %s178
        $region32: #{graph_conv_stack_forward.1} parent=23 // pred_fallthru
          _
      $region24: #{graph_conv_stack_forward.1} parent=5 // pred_fallthru
        _
      %p180 = scmp.le.s32.totalorder 1, %s13
      %p181 = scmp.lt.s32.totalorder %s13, 3
      %p182 = pnand %p180, %p181
      %p183 = pneg %p182
      // Predicated region
      $region33: #{graph_conv_stack_forward.1} parent=5 // pred_check
        _
      $region34: #{graph_conv_stack_forward.1} parent=5 // pred_check_branch
        %185 = sbr.rel (%p182) target = $region36
      $region35: #{graph_conv_stack_forward.1} parent=5 // pred_region
        %s186 = ssub.s32 %s13, 1
        %s187 = sand.u32 %s68, 1
        %s188 = scalar_lea.sflag [#allocation3], %s187
        %s189 = sand.u32 %s68, 1
        %s190 = smul.addr %s189, 128
        %s191 = scalar_lea.vmem [#allocation2], %s190
        // Predicated region
        $region37: #{graph_conv_stack_forward.1} parent=35 // pred_check
          %p192 = pneg %p81
        $region38: #{graph_conv_stack_forward.1} parent=35 // pred_check_branch
          %194 = sbr.rel (%p192) target = $region40
        $region39: #{graph_conv_stack_forward.1} parent=35 // pred_region
          %195 = dma.done %s188, 2048
        $region40: #{graph_conv_stack_forward.1} parent=35 // pred_fallthru
          _
        %p196 = pneg %p34
        %p197 = pneg %p31
        %p198 = pneg %p55
        %p199 = pneg %p52
        %s200 = sand.u32 %s68, 1
        %s201 = scalar_lea.sflag [#allocation3], %s200
        %s202 = sand.u32 %s68, 1
        %s203 = smul.addr %s202, 128
        %s204 = scalar_lea.vmem [#allocation2], %s203
        %p205 = pneg %p81
        %p206 = pneg %p78
        %p207 = scmp.lt.s32.totalorder %s18, 1
        %s208 = scalar_select %p207, %s18, 1
        %s209 = scalar_lea.vmem %s3, %s208
        %p210 = pneg %p107
        %p211 = pneg %p104
        %p212 = pneg %p128
        %p213 = pneg %p125
        %p214 = scmp.lt.s32.totalorder %s18, 1
        %s215 = scalar_select %p214, %s18, 1
        %s216 = scalar_lea.vmem %s3, %s215
        %p217 = scmp.eq.s32.totalorder %s18, 0
        // Predicated region
        $region41: #{graph_conv_stack_forward.1} parent=35 // pred_check
          %p218 = pneg %p217
        $region42: #{graph_conv_stack_forward.1} parent=35 // pred_check_branch
          %220 = sbr.rel (%p218) target = $region44
        $region43: #{graph_conv_stack_forward.1} parent=35 // pred_region
          %v221 = vld [vmem:[%s0] sm:$0xff]
          %v222 = vld [vmem:[%s0 + $0x8] sm:$0xff]
          %223 = vst [vmem:[%s4] sm:$0xff] %v221
          %224 = vst [vmem:[%s4 + $0x8] sm:$0xff] %v222
        $region44: #{graph_conv_stack_forward.1} parent=35 // pred_fallthru
          _
        %v225 = vld [vmem:[%s4] sm:$0xff]
        %v226 = vld [vmem:[%s4 + $0x8] sm:$0xff]
        %v227 = vld [vmem:[%s1] sm:$0xff]
        %v228 = vld [vmem:[%s1 + $0x8] sm:$0xff]
        %v229 = vld [vmem:[%s1 + $0x10] sm:$0xff]
        %v230 = vld [vmem:[%s1 + $0x18] sm:$0xff]
        %v231 = vld [vmem:[%s1 + $0x20] sm:$0xff]
        %v232 = vld [vmem:[%s1 + $0x28] sm:$0xff]
        %v233 = vld [vmem:[%s1 + $0x30] sm:$0xff]
        %v234 = vld [vmem:[%s1 + $0x38] sm:$0xff]
        %vm235 = vcmask 130048
        %v237 = vsel %vm235, %v227, 0
        %v240 = vsel %vm235, %v228, 0
        %v243 = vsel %vm235, %v229, 0
        %v246 = vsel %vm235, %v230, 0
        %v249 = vsel %vm235, %v231, 0
        %v252 = vsel %vm235, %v232, 0
        %v255 = vsel %vm235, %v233, 0
        %v258 = vsel %vm235, %v234, 0
        %260 = vmatprep.subr.mxu0 0.0
        %261 = vmatpush1.msra.mxu0 %v225
        %262 = vmatprep.subr.mxu0 0.0
        %263 = vmatpush1.msra.mxu0 %v226
        %264 = vmatprep.subr.mxu0 0.0
        %265 = vmatpush1.msra.mxu0 0.0
        %266 = vmatprep.subr.mxu0 0.0
        %267 = vmatpush1.msra.mxu0 0.0
        %268 = vmatprep.subr.mxu0 0.0
        %269 = vmatpush1.msra.mxu0 0.0
        %270 = vmatprep.subr.mxu0 0.0
        %271 = vmatpush1.msra.mxu0 0.0
        %272 = vmatprep.subr.mxu0 0.0
        %273 = vmatpush1.msra.mxu0 0.0
        %274 = vmatprep.subr.mxu0 0.0
        %275 = vmatpush1.msra.mxu0 0.0
        %276 = vmatprep.subr.mxu0 0.0
        %277 = vmatpush1.msra.mxu0 0.0
        %278 = vmatprep.subr.mxu0 0.0
        %279 = vmatpush1.msra.mxu0 0.0
        %280 = vmatprep.subr.mxu0 0.0
        %281 = vmatpush1.msra.mxu0 0.0
        %282 = vmatprep.subr.mxu0 0.0
        %283 = vmatpush1.msra.mxu0 0.0
        %284 = vmatprep.subr.mxu0 0.0
        %285 = vmatpush1.msra.mxu0 0.0
        %286 = vmatprep.subr.mxu0 0.0
        %287 = vmatpush1.msra.mxu0 0.0
        %288 = vmatprep.subr.mxu0 0.0
        %289 = vmatpush1.msra.mxu0 0.0
        %290 = vmatprep.subr.mxu0 0.0
        %291 = vmatpush1.msra.mxu0 0.0
        %292 = vmatprep.subr.mxu0 0.0
        %293 = vmatpush1.msra.mxu0 0.0
        %294 = vmatprep.subr.mxu0 0.0
        %295 = vmatpush1.msra.mxu0 0.0
        %296 = vmatprep.subr.mxu0 0.0
        %297 = vmatpush1.msra.mxu0 0.0
        %298 = vmatprep.subr.mxu0 0.0
        %299 = vmatpush1.msra.mxu0 0.0
        %300 = vmatprep.subr.mxu0 0.0
        %301 = vmatpush1.msra.mxu0 0.0
        %302 = vmatprep.subr.mxu0 0.0
        %303 = vmatpush1.msra.mxu0 0.0
        %304 = vmatprep.subr.mxu0 0.0
        %305 = vmatpush1.msra.mxu0 0.0
        %306 = vmatprep.subr.mxu0 0.0
        %307 = vmatpush1.msra.mxu0 0.0
        %308 = vmatprep.subr.mxu0 0.0
        %309 = vmatpush1.msra.mxu0 0.0
        %310 = vmatprep.subr.mxu0 0.0
        %311 = vmatpush1.msra.mxu0 0.0
        %312 = vmatprep.subr.mxu0 0.0
        %313 = vmatpush1.msra.mxu0 0.0
        %314 = vmatprep.subr.mxu0 0.0
        %315 = vmatpush1.msra.mxu0 0.0
        %316 = vmatprep.subr.mxu0 0.0
        %317 = vmatpush1.msra.mxu0 0.0
        %318 = vmatprep.subr.mxu0 0.0
        %319 = vmatpush1.msra.mxu0 0.0
        %320 = vmatprep.subr.mxu0 0.0
        %321 = vmatpush1.msra.mxu0 0.0
        %322 = vmatprep.subr.mxu0 0.0
        %323 = vmatpush1.msra.mxu0 0.0
        %324 = vmatprep.mubr.f32.mxu0 0.0
        %325 = vmatmul.mubr.f32.gmra.mrb[0].mxu0 %v237
        %v326 = vpop.f32.mrb[0].mxu0
        %v327 = vadd.f32 0.0, %v326
        %v328 = vpop.f32.mrb[0].mxu0
        %329 = vmatprep.mubr.f32.mxu0 0.0
        %330 = vmatmul.mubr.f32.gmra.mrb[0].mxu0 %v240
        %v331 = vpop.f32.mrb[0].mxu0
        %v332 = vadd.f32 0.0, %v331
        %v333 = vpop.f32.mrb[0].mxu0
        %334 = vmatprep.mubr.f32.mxu0 0.0
        %335 = vmatmul.mubr.f32.gmra.mrb[0].mxu0 %v243
        %v336 = vpop.f32.mrb[0].mxu0
        %v337 = vadd.f32 0.0, %v336
        %v338 = vpop.f32.mrb[0].mxu0
        %339 = vmatprep.mubr.f32.mxu0 0.0
        %340 = vmatmul.mubr.f32.gmra.mrb[0].mxu0 %v246
        %v341 = vpop.f32.mrb[0].mxu0
        %v342 = vadd.f32 0.0, %v341
        %v343 = vpop.f32.mrb[0].mxu0
        %344 = vmatprep.mubr.f32.mxu0 0.0
        %345 = vmatmul.mubr.f32.gmra.mrb[0].mxu0 %v249
        %v346 = vpop.f32.mrb[0].mxu0
        %v347 = vadd.f32 0.0, %v346
        %v348 = vpop.f32.mrb[0].mxu0
        %349 = vmatprep.mubr.f32.mxu0 0.0
        %350 = vmatmul.mubr.f32.gmra.mrb[0].mxu0 %v252
        %v351 = vpop.f32.mrb[0].mxu0
        %v352 = vadd.f32 0.0, %v351
        %v353 = vpop.f32.mrb[0].mxu0
        %354 = vmatprep.mubr.f32.mxu0 0.0
        %355 = vmatmul.mubr.f32.gmra.mrb[0].mxu0 %v255
        %v356 = vpop.f32.mrb[0].mxu0
        %v357 = vadd.f32 0.0, %v356
        %v358 = vpop.f32.mrb[0].mxu0
        %359 = vmatprep.mubr.f32.mxu0 0.0
        %360 = vmatmul.mubr.f32.gmra.mrb[0].mxu0 %v258
        %v361 = vpop.f32.mrb[0].mxu0
        %v362 = vadd.f32 0.0, %v361
        %v363 = vpop.f32.mrb[0].mxu0
        %364 = vdwg.mxu0
        %v365 = vld [vmem:[%s191] sm:$0xff]
        %v366 = vld [vmem:[%s191 + $0x8] sm:$0xff]
        %v367 = vld [vmem:[%s191 + $0x10] sm:$0xff]
        %v368 = vld [vmem:[%s191 + $0x18] sm:$0xff]
        %s369 = scalar_lea.vmem %s191, 32 [#allocation2]
        %v370 = vld [vmem:[%s369] sm:$0xff]
        %v371 = vld [vmem:[%s369 + $0x8] sm:$0xff]
        %v372 = vld [vmem:[%s369 + $0x10] sm:$0xff]
        %v373 = vld [vmem:[%s369 + $0x18] sm:$0xff]
        %vm374 = vcmask 261120
        %v376 = vsel %vm374, %v337, 0
        %v379 = vsel %vm374, %v342, 0
        %381 = vmatprep.subr.mxu0 0.0
        %382 = vmatpush1.msra.mxu0 %v370
        %383 = vmatprep.subr.mxu0 0.0
        %384 = vmatpush1.msra.mxu0 %v371
        %385 = vmatprep.subr.mxu0 0.0
        %386 = vmatpush1.msra.mxu0 %v372
        %387 = vmatprep.subr.mxu0 0.0
        %388 = vmatpush1.msra.mxu0 %v373
        %389 = vmatprep.subr.mxu0 0.0
        %390 = vmatpush1.msra.mxu0 0.0
        %391 = vmatprep.subr.mxu0 0.0
        %392 = vmatpush1.msra.mxu0 0.0
        %393 = vmatprep.subr.mxu0 0.0
        %394 = vmatpush1.msra.mxu0 0.0
        %395 = vmatprep.subr.mxu0 0.0
        %396 = vmatpush1.msra.mxu0 0.0
        %397 = vmatprep.subr.mxu0 0.0
        %398 = vmatpush1.msra.mxu0 0.0
        %399 = vmatprep.subr.mxu0 0.0
        %400 = vmatpush1.msra.mxu0 0.0
        %401 = vmatprep.subr.mxu0 0.0
        %402 = vmatpush1.msra.mxu0 0.0
        %403 = vmatprep.subr.mxu0 0.0
        %404 = vmatpush1.msra.mxu0 0.0
        %405 = vmatprep.subr.mxu0 0.0
        %406 = vmatpush1.msra.mxu0 0.0
        %407 = vmatprep.subr.mxu0 0.0
        %408 = vmatpush1.msra.mxu0 0.0
        %409 = vmatprep.subr.mxu0 0.0
        %410 = vmatpush1.msra.mxu0 0.0
        %411 = vmatprep.subr.mxu0 0.0
        %412 = vmatpush1.msra.mxu0 0.0
        %413 = vmatprep.subr.mxu0 0.0
        %414 = vmatpush1.msra.mxu0 0.0
        %415 = vmatprep.subr.mxu0 0.0
        %416 = vmatpush1.msra.mxu0 0.0
        %417 = vmatprep.subr.mxu0 0.0
        %418 = vmatpush1.msra.mxu0 0.0
        %419 = vmatprep.subr.mxu0 0.0
        %420 = vmatpush1.msra.mxu0 0.0
        %421 = vmatprep.subr.mxu0 0.0
        %422 = vmatpush1.msra.mxu0 0.0
        %423 = vmatprep.subr.mxu0 0.0
        %424 = vmatpush1.msra.mxu0 0.0
        %425 = vmatprep.subr.mxu0 0.0
        %426 = vmatpush1.msra.mxu0 0.0
        %427 = vmatprep.subr.mxu0 0.0
        %428 = vmatpush1.msra.mxu0 0.0
        %429 = vmatprep.subr.mxu0 0.0
        %430 = vmatpush1.msra.mxu0 0.0
        %431 = vmatprep.subr.mxu0 0.0
        %432 = vmatpush1.msra.mxu0 0.0
        %433 = vmatprep.subr.mxu0 0.0
        %434 = vmatpush1.msra.mxu0 0.0
        %435 = vmatprep.subr.mxu0 0.0
        %436 = vmatpush1.msra.mxu0 0.0
        %437 = vmatprep.subr.mxu0 0.0
        %438 = vmatpush1.msra.mxu0 0.0
        %439 = vmatprep.subr.mxu0 0.0
        %440 = vmatpush1.msra.mxu0 0.0
        %441 = vmatprep.subr.mxu0 0.0
        %442 = vmatpush1.msra.mxu0 0.0
        %443 = vmatprep.subr.mxu0 0.0
        %444 = vmatpush1.msra.mxu0 0.0
        %445 = vmatprep.mubr.f32.mxu0 0.0
        %446 = vmatmul.mubr.f32.gmra.mrb[0].mxu0 %v376
        %v447 = vpop.f32.mrb[0].mxu0
        %v448 = vadd.f32 0.0, %v447
        %v449 = vpop.f32.mrb[0].mxu0
        %450 = vmatprep.mubr.f32.mxu0 0.0
        %451 = vmatmul.mubr.f32.gmra.mrb[0].mxu0 %v379
        %v452 = vpop.f32.mrb[0].mxu0
        %v453 = vadd.f32 0.0, %v452
        %v454 = vpop.f32.mrb[0].mxu0
        %455 = vdwg.mxu0
        %v457 = vsel %vm374, %v327, 0
        %v460 = vsel %vm374, %v332, 0
        %462 = vmatprep.subr.mxu0 0.0
        %463 = vmatpush1.msra.mxu0 %v365
        %464 = vmatprep.subr.mxu0 0.0
        %465 = vmatpush1.msra.mxu0 %v366
        %466 = vmatprep.subr.mxu0 0.0
        %467 = vmatpush1.msra.mxu0 %v367
        %468 = vmatprep.subr.mxu0 0.0
        %469 = vmatpush1.msra.mxu0 %v368
        %470 = vmatprep.subr.mxu0 0.0
        %471 = vmatpush1.msra.mxu0 0.0
        %472 = vmatprep.subr.mxu0 0.0
        %473 = vmatpush1.msra.mxu0 0.0
        %474 = vmatprep.subr.mxu0 0.0
        %475 = vmatpush1.msra.mxu0 0.0
        %476 = vmatprep.subr.mxu0 0.0
        %477 = vmatpush1.msra.mxu0 0.0
        %478 = vmatprep.subr.mxu0 0.0
        %479 = vmatpush1.msra.mxu0 0.0
        %480 = vmatprep.subr.mxu0 0.0
        %481 = vmatpush1.msra.mxu0 0.0
        %482 = vmatprep.subr.mxu0 0.0
        %483 = vmatpush1.msra.mxu0 0.0
        %484 = vmatprep.subr.mxu0 0.0
        %485 = vmatpush1.msra.mxu0 0.0
        %486 = vmatprep.subr.mxu0 0.0
        %487 = vmatpush1.msra.mxu0 0.0
        %488 = vmatprep.subr.mxu0 0.0
        %489 = vmatpush1.msra.mxu0 0.0
        %490 = vmatprep.subr.mxu0 0.0
        %491 = vmatpush1.msra.mxu0 0.0
        %492 = vmatprep.subr.mxu0 0.0
        %493 = vmatpush1.msra.mxu0 0.0
        %494 = vmatprep.subr.mxu0 0.0
        %495 = vmatpush1.msra.mxu0 0.0
        %496 = vmatprep.subr.mxu0 0.0
        %497 = vmatpush1.msra.mxu0 0.0
        %498 = vmatprep.subr.mxu0 0.0
        %499 = vmatpush1.msra.mxu0 0.0
        %500 = vmatprep.subr.mxu0 0.0
        %501 = vmatpush1.msra.mxu0 0.0
        %502 = vmatprep.subr.mxu0 0.0
        %503 = vmatpush1.msra.mxu0 0.0
        %504 = vmatprep.subr.mxu0 0.0
        %505 = vmatpush1.msra.mxu0 0.0
        %506 = vmatprep.subr.mxu0 0.0
        %507 = vmatpush1.msra.mxu0 0.0
        %508 = vmatprep.subr.mxu0 0.0
        %509 = vmatpush1.msra.mxu0 0.0
        %510 = vmatprep.subr.mxu0 0.0
        %511 = vmatpush1.msra.mxu0 0.0
        %512 = vmatprep.subr.mxu0 0.0
        %513 = vmatpush1.msra.mxu0 0.0
        %514 = vmatprep.subr.mxu0 0.0
        %515 = vmatpush1.msra.mxu0 0.0
        %516 = vmatprep.subr.mxu0 0.0
        %517 = vmatpush1.msra.mxu0 0.0
        %518 = vmatprep.subr.mxu0 0.0
        %519 = vmatpush1.msra.mxu0 0.0
        %520 = vmatprep.subr.mxu0 0.0
        %521 = vmatpush1.msra.mxu0 0.0
        %522 = vmatprep.subr.mxu0 0.0
        %523 = vmatpush1.msra.mxu0 0.0
        %524 = vmatprep.subr.mxu0 0.0
        %525 = vmatpush1.msra.mxu0 0.0
        %526 = vmatprep.mubr.f32.mxu0 0.0
        %527 = vmatmul.mubr.f32.gmra.mrb[0].mxu0 %v457
        %v528 = vpop.f32.mrb[0].mxu0
        %v529 = vadd.f32 %v448, %v528
        %v530 = vpop.f32.mrb[0].mxu0
        %531 = vmatprep.mubr.f32.mxu0 0.0
        %532 = vmatmul.mubr.f32.gmra.mrb[0].mxu0 %v460
        %v533 = vpop.f32.mrb[0].mxu0
        %v534 = vadd.f32 %v453, %v533
        %v535 = vpop.f32.mrb[0].mxu0
        %536 = vdwg.mxu0
        %s537 = scalar_lea.vmem %s191, 64 [#allocation2]
        %v538 = vld [vmem:[%s537] sm:$0xff]
        %v539 = vld [vmem:[%s537 + $0x8] sm:$0xff]
        %v540 = vld [vmem:[%s537 + $0x10] sm:$0xff]
        %v541 = vld [vmem:[%s537 + $0x18] sm:$0xff]
        %v543 = vsel %vm374, %v347, 0
        %v546 = vsel %vm374, %v352, 0
        %548 = vmatprep.subr.mxu0 0.0
        %549 = vmatpush1.msra.mxu0 %v538
        %550 = vmatprep.subr.mxu0 0.0
        %551 = vmatpush1.msra.mxu0 %v539
        %552 = vmatprep.subr.mxu0 0.0
        %553 = vmatpush1.msra.mxu0 %v540
        %554 = vmatprep.subr.mxu0 0.0
        %555 = vmatpush1.msra.mxu0 %v541
        %556 = vmatprep.subr.mxu0 0.0
        %557 = vmatpush1.msra.mxu0 0.0
        %558 = vmatprep.subr.mxu0 0.0
        %559 = vmatpush1.msra.mxu0 0.0
        %560 = vmatprep.subr.mxu0 0.0
        %561 = vmatpush1.msra.mxu0 0.0
        %562 = vmatprep.subr.mxu0 0.0
        %563 = vmatpush1.msra.mxu0 0.0
        %564 = vmatprep.subr.mxu0 0.0
        %565 = vmatpush1.msra.mxu0 0.0
        %566 = vmatprep.subr.mxu0 0.0
        %567 = vmatpush1.msra.mxu0 0.0
        %568 = vmatprep.subr.mxu0 0.0
        %569 = vmatpush1.msra.mxu0 0.0
        %570 = vmatprep.subr.mxu0 0.0
        %571 = vmatpush1.msra.mxu0 0.0
        %572 = vmatprep.subr.mxu0 0.0
        %573 = vmatpush1.msra.mxu0 0.0
        %574 = vmatprep.subr.mxu0 0.0
        %575 = vmatpush1.msra.mxu0 0.0
        %576 = vmatprep.subr.mxu0 0.0
        %577 = vmatpush1.msra.mxu0 0.0
        %578 = vmatprep.subr.mxu0 0.0
        %579 = vmatpush1.msra.mxu0 0.0
        %580 = vmatprep.subr.mxu0 0.0
        %581 = vmatpush1.msra.mxu0 0.0
        %582 = vmatprep.subr.mxu0 0.0
        %583 = vmatpush1.msra.mxu0 0.0
        %584 = vmatprep.subr.mxu0 0.0
        %585 = vmatpush1.msra.mxu0 0.0
        %586 = vmatprep.subr.mxu0 0.0
        %587 = vmatpush1.msra.mxu0 0.0
        %588 = vmatprep.subr.mxu0 0.0
        %589 = vmatpush1.msra.mxu0 0.0
        %590 = vmatprep.subr.mxu0 0.0
        %591 = vmatpush1.msra.mxu0 0.0
        %592 = vmatprep.subr.mxu0 0.0
        %593 = vmatpush1.msra.mxu0 0.0
        %594 = vmatprep.subr.mxu0 0.0
        %595 = vmatpush1.msra.mxu0 0.0
        %596 = vmatprep.subr.mxu0 0.0
        %597 = vmatpush1.msra.mxu0 0.0
        %598 = vmatprep.subr.mxu0 0.0
        %599 = vmatpush1.msra.mxu0 0.0
        %600 = vmatprep.subr.mxu0 0.0
        %601 = vmatpush1.msra.mxu0 0.0
        %602 = vmatprep.subr.mxu0 0.0
        %603 = vmatpush1.msra.mxu0 0.0
        %604 = vmatprep.subr.mxu0 0.0
        %605 = vmatpush1.msra.mxu0 0.0
        %606 = vmatprep.subr.mxu0 0.0
        %607 = vmatpush1.msra.mxu0 0.0
        %608 = vmatprep.subr.mxu0 0.0
        %609 = vmatpush1.msra.mxu0 0.0
        %610 = vmatprep.subr.mxu0 0.0
        %611 = vmatpush1.msra.mxu0 0.0
        %612 = vmatprep.mubr.f32.mxu0 0.0
        %613 = vmatmul.mubr.f32.gmra.mrb[0].mxu0 %v543
        %v614 = vpop.f32.mrb[0].mxu0
        %v615 = vadd.f32 0.0, %v614
        %v616 = vpop.f32.mrb[0].mxu0
        %617 = vmatprep.mubr.f32.mxu0 0.0
        %618 = vmatmul.mubr.f32.gmra.mrb[0].mxu0 %v546
        %v619 = vpop.f32.mrb[0].mxu0
        %v620 = vadd.f32 0.0, %v619
        %v621 = vpop.f32.mrb[0].mxu0
        %622 = vdwg.mxu0
        %v623 = vadd.f32 %v529, %v615
        %v624 = vadd.f32 %v534, %v620
        %s625 = scalar_lea.vmem %s191, 96 [#allocation2]
        %v626 = vld [vmem:[%s625] sm:$0xff]
        %v627 = vld [vmem:[%s625 + $0x8] sm:$0xff]
        %v628 = vld [vmem:[%s625 + $0x10] sm:$0xff]
        %v629 = vld [vmem:[%s625 + $0x18] sm:$0xff]
        %v631 = vsel %vm374, %v357, 0
        %v634 = vsel %vm374, %v362, 0
        %636 = vmatprep.subr.mxu0 0.0
        %637 = vmatpush1.msra.mxu0 %v626
        %638 = vmatprep.subr.mxu0 0.0
        %639 = vmatpush1.msra.mxu0 %v627
        %640 = vmatprep.subr.mxu0 0.0
        %641 = vmatpush1.msra.mxu0 %v628
        %642 = vmatprep.subr.mxu0 0.0
        %643 = vmatpush1.msra.mxu0 %v629
        %644 = vmatprep.subr.mxu0 0.0
        %645 = vmatpush1.msra.mxu0 0.0
        %646 = vmatprep.subr.mxu0 0.0
        %647 = vmatpush1.msra.mxu0 0.0
        %648 = vmatprep.subr.mxu0 0.0
        %649 = vmatpush1.msra.mxu0 0.0
        %650 = vmatprep.subr.mxu0 0.0
        %651 = vmatpush1.msra.mxu0 0.0
        %652 = vmatprep.subr.mxu0 0.0
        %653 = vmatpush1.msra.mxu0 0.0
        %654 = vmatprep.subr.mxu0 0.0
        %655 = vmatpush1.msra.mxu0 0.0
        %656 = vmatprep.subr.mxu0 0.0
        %657 = vmatpush1.msra.mxu0 0.0
        %658 = vmatprep.subr.mxu0 0.0
        %659 = vmatpush1.msra.mxu0 0.0
        %660 = vmatprep.subr.mxu0 0.0
        %661 = vmatpush1.msra.mxu0 0.0
        %662 = vmatprep.subr.mxu0 0.0
        %663 = vmatpush1.msra.mxu0 0.0
        %664 = vmatprep.subr.mxu0 0.0
        %665 = vmatpush1.msra.mxu0 0.0
        %666 = vmatprep.subr.mxu0 0.0
        %667 = vmatpush1.msra.mxu0 0.0
        %668 = vmatprep.subr.mxu0 0.0
        %669 = vmatpush1.msra.mxu0 0.0
        %670 = vmatprep.subr.mxu0 0.0
        %671 = vmatpush1.msra.mxu0 0.0
        %672 = vmatprep.subr.mxu0 0.0
        %673 = vmatpush1.msra.mxu0 0.0
        %674 = vmatprep.subr.mxu0 0.0
        %675 = vmatpush1.msra.mxu0 0.0
        %676 = vmatprep.subr.mxu0 0.0
        %677 = vmatpush1.msra.mxu0 0.0
        %678 = vmatprep.subr.mxu0 0.0
        %679 = vmatpush1.msra.mxu0 0.0
        %680 = vmatprep.subr.mxu0 0.0
        %681 = vmatpush1.msra.mxu0 0.0
        %682 = vmatprep.subr.mxu0 0.0
        %683 = vmatpush1.msra.mxu0 0.0
        %684 = vmatprep.subr.mxu0 0.0
        %685 = vmatpush1.msra.mxu0 0.0
        %686 = vmatprep.subr.mxu0 0.0
        %687 = vmatpush1.msra.mxu0 0.0
        %688 = vmatprep.subr.mxu0 0.0
        %689 = vmatpush1.msra.mxu0 0.0
        %690 = vmatprep.subr.mxu0 0.0
        %691 = vmatpush1.msra.mxu0 0.0
        %692 = vmatprep.subr.mxu0 0.0
        %693 = vmatpush1.msra.mxu0 0.0
        %694 = vmatprep.subr.mxu0 0.0
        %695 = vmatpush1.msra.mxu0 0.0
        %696 = vmatprep.subr.mxu0 0.0
        %697 = vmatpush1.msra.mxu0 0.0
        %698 = vmatprep.subr.mxu0 0.0
        %699 = vmatpush1.msra.mxu0 0.0
        %700 = vmatprep.mubr.f32.mxu0 0.0
        %701 = vmatmul.mubr.f32.gmra.mrb[0].mxu0 %v631
        %v702 = vpop.f32.mrb[0].mxu0
        %v703 = vadd.f32 0.0, %v702
        %v704 = vpop.f32.mrb[0].mxu0
        %705 = vmatprep.mubr.f32.mxu0 0.0
        %706 = vmatmul.mubr.f32.gmra.mrb[0].mxu0 %v634
        %v707 = vpop.f32.mrb[0].mxu0
        %v708 = vadd.f32 0.0, %v707
        %v709 = vpop.f32.mrb[0].mxu0
        %710 = vdwg.mxu0
        %v711 = vadd.f32 %v623, %v703
        %v712 = vadd.f32 %v624, %v708
        %v713 = vld [vmem:[%s216] sm:$0x1]
        %v715 = vlaneseq
        %v716 = vshrl.u32 %v715, 7
        %v717 = vsub.s32 0, %v716
        %v718 = vrot.slane %v713, %v717
        %v720 = vadd.f32 %v711, %v718
        %v721 = vadd.f32 %v712, %v718
        %v722 = vmax.f32 %v720, 0.0
        %v723 = vmax.f32 %v721, 0.0
        %724 = vst [vmem:[%s4] sm:$0xff] %v722
        %725 = vst [vmem:[%s4 + $0x8] sm:$0xff] %v723
        // Predicated region
        $region45: #{graph_conv_stack_forward.1} parent=35 // pred_check
          %p726 = pneg %p125
        $region46: #{graph_conv_stack_forward.1} parent=35 // pred_check_branch
          %728 = sbr.rel (%p726) target = $region48
        $region47: #{graph_conv_stack_forward.1} parent=35 // pred_region
          _
        $region48: #{graph_conv_stack_forward.1} parent=35 // pred_fallthru
          _
        // Predicated region
        $region49: #{graph_conv_stack_forward.1} parent=35 // pred_check
          %p729 = pneg %p125
        $region50: #{graph_conv_stack_forward.1} parent=35 // pred_check_branch
          %731 = sbr.rel (%p729) target = $region52
        $region51: #{graph_conv_stack_forward.1} parent=35 // pred_region
          _
        $region52: #{graph_conv_stack_forward.1} parent=35 // pred_fallthru
          _
      $region36: #{graph_conv_stack_forward.1} parent=5 // pred_fallthru
        _
      %p732 = scmp.le.s32.totalorder 2, %s13
      // Predicated region
      $region53: #{graph_conv_stack_forward.1} parent=5 // pred_check
        %p733 = pneg %p732
      $region54: #{graph_conv_stack_forward.1} parent=5 // pred_check_branch
        %735 = sbr.rel (%p733) target = $region56
      $region55: #{graph_conv_stack_forward.1} parent=5 // pred_region
        %s736 = ssub.s32 %s13, 2
      $region56: #{graph_conv_stack_forward.1} parent=5 // pred_fallthru
        _
    $region6: #{graph_conv_stack_forward.1} parent=1 // loop_footer
      %s17 = sadd.s32 1, %s13
    $region7: #{graph_conv_stack_forward.1} parent=1 // loop_footer_branch
      %12 = sbr.rel target = $region3
    $region8: #{graph_conv_stack_forward.1} parent=1 // loop_exit
      _
    %737 = vsyncpa [#allocation3], 1
    %s738 = scalar_lea.sflag [#allocation3], 1
    %739 = vsyncpa %s738, 1

</llo_original>
